<compile_context>
chip_gen: v7x
topology: tpu7x:2x2x1
jax: 0.10.0
libtpu: 0.0.40
codegen_flags: <defaults>
</compile_context>

<pallas_src>
import functools

import jax
import jax.numpy as jnp
from jax.experimental import pallas as pl
from jax.experimental.pallas import tpu as pltpu


def _rezero_kernel(g_ref, x_ref, o_ref, *, fn):
    # g_ref: (1,) f32 scalar in SMEM (scalar prefetch).
    # x_ref / o_ref: (block_rows, lane_cols) tiles in VMEM.
    g = g_ref[0]
    # Compute in f32 and cast back once per tile (mem-bound, so the extra VALU
    # work is hidden; keeps bf16 off v5e's missing bf16 VPU/EUP path).
    y = fn(x_ref[...].astype(jnp.float32)) * g
    o_ref[...] = y.astype(o_ref.dtype)


def _pick_lane_cols(n_total, preferred=1024):
    """Pick a lane-dense (multiple of 128) column count.

    Prefer one that divides n_total exactly so the wrapper never needs an
    extra HBM pad/copy pass; otherwise fall back to `preferred` (or 128 for
    tiny inputs) with padding.
    """
    for cand in (4096, 2048, 1024, 512, 384, 256, 128):
        if cand <= n_total and n_total % cand == 0:
            return cand, 0
    cols = preferred if n_total >= preferred else 128
    pad = (-n_total) % cols
    return cols, pad


def rezero(x, g, fn=lambda t: t, *, elementwise=True,
           target_tile_bytes=4 << 20):
    """out = fn(x) * g with the hot path inside a Pallas kernel.

    x: any-rank float array (e.g. [B, S, D])
    g: scalar learnable parameter
    fn: jnp-traceable function applied per tile inside the kernel
    elementwise: if True, x is flattened to a lane-dense 2-D slab (last dim a
        multiple of 128). If False, the last dim of x is kept whole per tile so
        row-wise fns (e.g. per-row normalization over D) remain correct.
    """
    orig_shape = x.shape
    dtype = x.dtype
    itemsize = jnp.dtype(dtype).itemsize
    n_total = x.size

    if elementwise:
        lane_cols, pad_flat = _pick_lane_cols(n_total)
        flat = x.reshape(-1)
        if pad_flat:
            flat = jnp.pad(flat, (0, pad_flat))
        x2 = flat.reshape(-1, lane_cols)
    else:
        # Keep hidden dim whole per tile (full-extent last dim in the block).
        lane_cols = orig_shape[-1]
        x2 = x.reshape(-1, lane_cols)

    rows = x2.shape[0]

    # Tile sizing: ~target_tile_bytes per input tile; block rows are either the
    # full extent (single tile) or a multiple of 8 (sublane granularity).
    max_rows = max(8, int(target_tile_bytes) // max(1, lane_cols * itemsize))
    if rows <= max_rows:
        block_rows = rows                      # single tile == full extent
    else:
        block_rows = (max_rows // 8) * 8       # multiple of 8 sublanes

    pad_rows = (-rows) % block_rows
    if pad_rows:
        x2 = jnp.pad(x2, ((0, pad_rows), (0, 0)))
    padded_rows = rows + pad_rows
    grid = (padded_rows // block_rows,)

    tile_bytes = block_rows * lane_cols * itemsize
    # 2 buffers each for the input and output tile + headroom; cap well under
    # v7x's 64 MiB physical VMEM.
    vmem_limit = int(min(max(4 * tile_bytes + (4 << 20), 16 << 20), 48 << 20))

    g_arr = jnp.asarray(g, dtype=jnp.float32).reshape((1,))
    kernel = functools.partial(_rezero_kernel, fn=fn)

    # Default double-buffering; bump to pl.Buffered(3) only if profiling shows
    # exposed DMA at step boundaries.
    out2 = pl.pallas_call(
        kernel,
        out_shape=jax.ShapeDtypeStruct((padded_rows, lane_cols), dtype),
        grid_spec=pltpu.PrefetchScalarGridSpec(
            num_scalar_prefetch=1,             # g lands in SMEM before the grid
            grid=grid,
            in_specs=[
                pl.BlockSpec((block_rows, lane_cols), lambda i, g_ref: (i, 0)),
            ],
            out_specs=pl.BlockSpec((block_rows, lane_cols),
                                   lambda i, g_ref: (i, 0)),
        ),
        compiler_params=pltpu.CompilerParams(
            dimension_semantics=("parallel",),
            vmem_limit_bytes=vmem_limit,
        ),
    )(g_arr, x2)

    if elementwise:
        return out2.reshape(-1)[:n_total].reshape(orig_shape)
    return out2[:rows].reshape(orig_shape)


if __name__ == "__main__":
    key = jax.random.PRNGKey(0)
    B, S, D = 2, 8, 32
    x = jax.random.normal(key, (B, S, D), dtype=jnp.float32)

    # Deterministic parameter init, matching nn.Parameter(torch.tensor(0.001)).
    g = jnp.float32(0.001)

    # Wrapped fn: ReZero is generic; GELU is a representative elementwise fn.
    fn = jax.nn.gelu

    out = jax.block_until_ready(rezero(x, g, fn=fn))
    ref = fn(x) * g
    assert out.shape == (B, S, D)
    assert jnp.allclose(out, ref, atol=1e-6, rtol=1e-5), "mismatch vs reference"

    # Row-preserving (non-elementwise) path with identity fn.
    out_rows = jax.block_until_ready(rezero(x, g, fn=lambda t: t,
                                            elementwise=False))
    assert jnp.allclose(out_rows, x * g, atol=1e-6, rtol=1e-5)

    # Ragged / bf16 path (exercises the fallback padding branch).
    xr = jax.random.normal(jax.random.PRNGKey(1), (3, 5, 7), dtype=jnp.bfloat16)
    out_r = jax.block_until_ready(rezero(xr, g, fn=lambda t: t))
    ref_r = (xr.astype(jnp.float32) * g).astype(jnp.bfloat16)
    assert jnp.allclose(out_r.astype(jnp.float32),
                        ref_r.astype(jnp.float32), atol=1e-3, rtol=1e-2)

    print("KERNEL_OK")
</pallas_src>

<mosaic_0001>
module attributes {stable_mosaic.version = 11 : i64} {
  func.func @_rezero_kernel(%arg0: i32, %arg1: memref<1xf32, #tpu.memory_space<smem>>, %arg2: memref<1x512xf32, #tpu.memory_space<vmem>>, %arg3: memref<1x512xf32, #tpu.memory_space<vmem>>) attributes {dimension_semantics = [#tpu.dimension_semantics<parallel>], iteration_bounds = array<i64: 1>, scalar_prefetch = 1 : i64, scratch_operands = 0 : i64, tpu.core_type = #tpu.core_type<tc>, window_params = [{transform_indices = @transform_0, window_bounds = array<i64: 1, 512>}, {transform_indices = @transform_1, window_bounds = array<i64: 1, 512>}]} {
    %c0 = arith.constant 0 : index
    %0 = memref.load %arg1[%c0] : memref<1xf32, #tpu.memory_space<smem>>
    %c0_0 = arith.constant 0 : index
    %c0_1 = arith.constant 0 : index
    %1 = vector.load %arg2[%c0_0, %c0_1] : memref<1x512xf32, #tpu.memory_space<vmem>>, vector<1x512xf32>
    %2 = arith.mulf %1, %1 : vector<1x512xf32>
    %3 = arith.mulf %1, %2 : vector<1x512xf32>
    %cst = arith.constant 4.471500e-02 : f32
    %4 = vector.broadcast %cst : f32 to vector<1x512xf32>
    %5 = arith.mulf %4, %3 : vector<1x512xf32>
    %6 = arith.addf %1, %5 : vector<1x512xf32>
    %cst_2 = arith.constant 0.797884583 : f32
    %7 = vector.broadcast %cst_2 : f32 to vector<1x512xf32>
    %8 = arith.mulf %7, %6 : vector<1x512xf32>
    %9 = math.tanh %8 : vector<1x512xf32>
    %cst_3 = arith.constant 1.000000e+00 : f32
    %10 = vector.broadcast %cst_3 : f32 to vector<1x512xf32>
    %11 = arith.addf %10, %9 : vector<1x512xf32>
    %cst_4 = arith.constant 5.000000e-01 : f32
    %12 = vector.broadcast %cst_4 : f32 to vector<1x512xf32>
    %13 = arith.mulf %12, %11 : vector<1x512xf32>
    %14 = arith.mulf %1, %13 : vector<1x512xf32>
    %15 = vector.broadcast %0 : f32 to vector<1x512xf32>
    %16 = arith.mulf %14, %15 : vector<1x512xf32>
    %c0_5 = arith.constant 0 : index
    %c0_6 = arith.constant 0 : index
    %17 = vector.load %arg3[%c0_5, %c0_6] : memref<1x512xf32, #tpu.memory_space<vmem>>, vector<1x512xf32>
    tpu.vector_store %arg3[%c0_5, %c0_6], %16 {strides = array<i32>} : memref<1x512xf32, #tpu.memory_space<vmem>>, vector<1x512xf32>,
    return
  }
  func.func @transform_0(%arg0: i32, %arg1: memref<1xf32, #tpu.memory_space<smem>>) -> (i32, i32) {
    %c0_i32 = arith.constant 0 : i32
    %c0_i32_0 = arith.constant 0 : i32
    return %arg0, %c0_i32 : i32, i32
  }
  func.func @transform_1(%arg0: i32, %arg1: memref<1xf32, #tpu.memory_space<smem>>) -> (i32, i32) {
    %c0_i32 = arith.constant 0 : i32
    %c0_i32_0 = arith.constant 0 : i32
    return %arg0, %c0_i32 : i32, i32
  }
}

</mosaic_0001>

<llo_original>
// kernel: tpu_custom_call.1
$region0: #{tpu_custom_call.1}
  #allocation0 [shape = 'u32[]', space=smem, size = 0x4, offset = 0x4, fixed_abs, tag = 'smem constant byte address 0x4 - core index']
  #allocation1 [shape = 'u32[144,128]{1,0:T(1,128)}', space=vmem, size = 0x12000, scoped, tag = 'internal scratch']
  #allocation2 [shape = 's32[1]{0}', space=sflag, size = 0x4, scoped, tag = 'scoped memory for tpu_custom_call.1']
  #allocation3 [shape = 'f32[1]{0:T(128)S(6)}', space=smem, size = 0x200, scoped, tag = 'prefetched SMEM operand 0']
  %s0 = inlined_call_operand.<no memory space> [shape: f32[1], index: 0, kind: input, shape index: {}]
  %s1 = inlined_call_operand.hbm [shape: f32[1,512], index: 1, kind: input, shape index: {}]
  %s2 = inlined_call_operand.hbm [shape: f32[1,512], index: 2, kind: output, shape index: {}]
  %s3 = sld [smem:[#allocation0]]
  $region18: #{tpu_custom_call.1} parent=0
    _
  %s5 = ssub.s32 1, %s3
  %s6 = scalar_select 0, %s5, %s3
  %7 = sst [smem:[#allocation3]] %s0
  $region1: #{tpu_custom_call.1} parent=0
    #allocation4 [shape = 'u8[2048]{0}', space=vmem, size = 0x800, scoped, tag = 'input window, operand 1, single buffered']
    #allocation5 [shape = 's32[1]{0}', space=sflag, size = 0x4, scoped, tag = 'scoped memory for tpu_custom_call.1']
    #allocation6 [shape = 's32[1]{0}', space=sflag, size = 0x4, scoped, tag = 'scoped memory for tpu_custom_call.1']
    #allocation7 [shape = 'u8[2048]{0}', space=vmem, size = 0x800, scoped, tag = 'output window, operand 0, single buffered']
    %8 = vsyncpa [#allocation5], 0
    %9 = vsyncpa [#allocation6], 0
    // Predicated region
    $region2: #{tpu_custom_call.1} parent=1 // pred_check
      _
    $region3: #{tpu_custom_call.1} parent=1 // pred_check_branch
      %11 = sbr.rel (0) target = $region5
    $region4: #{tpu_custom_call.1} parent=1 // pred_region
      %s13 = ssub.s32 64, 64
      %14 = vsyncadd [#allocation5], %s13
      %s16 = sshll.u32 [#allocation4], 4
      %s17 = int_to_ptr.vmem [resolvable:$true] %s16
      %19 = dma.hbm_to_vmem [thread:$0]  %s1, 64, %s17, [#allocation5]
    $region5: #{tpu_custom_call.1} parent=1 // pred_fallthru
      _
    // Predicated region
    $region6: #{tpu_custom_call.1} parent=1 // pred_check
      _
    $region7: #{tpu_custom_call.1} parent=1 // pred_check_branch
      %21 = sbr.rel (0) target = $region9
    $region8: #{tpu_custom_call.1} parent=1 // pred_region
      %22 = dma.done [#allocation5], 64
    $region9: #{tpu_custom_call.1} parent=1 // pred_fallthru
      _
    %s23 = sld [smem:[#allocation3]]
    %v24 = vld [vmem:[#allocation4] sm:$0xf]
    %v25 = vmul.f32 %v24, %v24
    %v26 = vmul.f32 %v24, %v25
    %v27 = vmul.f32 %v26, 0.044715
    %v28 = vadd.f32 %v24, %v27
    %v29 = vmul.f32 %v28, 0.7978846
    %v30 = vtanh.pop %v29
    %v31 = vadd.f32 %v30, 1.0
    %v32 = vmul.f32 %v31, 0.5
    %v33 = vmul.f32 %v24, %v32
    %v34 = vstv %s23
    %v35 = vmul.f32 %v33, %v34
    %v36 = vlaneseq
    %vm37 = vcmp.ge.s32.totalorder %v36, 0
    %vm38 = vcmp.lt.s32.totalorder %v36, 512
    %vm39 = vmand %vm37, %vm38
    %40 = vst.msk [vmem:[#allocation7] sm:$0xf] %vm39, %v35
    // Predicated region
    $region10: #{tpu_custom_call.1} parent=1 // pred_check
      _
    $region11: #{tpu_custom_call.1} parent=1 // pred_check_branch
      %42 = sbr.rel (0) target = $region13
    $region12: #{tpu_custom_call.1} parent=1 // pred_region
      %s44 = ssub.s32 64, 64
      %45 = vsyncadd [#allocation6], %s44
      %s47 = sshll.u32 [#allocation7], 4
      %s48 = int_to_ptr.vmem [resolvable:$true] %s47
      %50 = dma.vmem_to_hbm [thread:$0]  %s48, 64, %s2, [#allocation6]
    $region13: #{tpu_custom_call.1} parent=1 // pred_fallthru
      _
    // Predicated region
    $region14: #{tpu_custom_call.1} parent=1 // pred_check
      _
    $region15: #{tpu_custom_call.1} parent=1 // pred_check_branch
      %52 = sbr.rel (0) target = $region17
    $region16: #{tpu_custom_call.1} parent=1 // pred_region
      %53 = dma.done [#allocation6], 64
    $region17: #{tpu_custom_call.1} parent=1 // pred_fallthru
      _
    %54 = vsyncpa [#allocation5], 1
    %55 = vsyncpa [#allocation6], 1

</llo_original>
